<compile_context>
chip_gen: v6e
topology: v6e:2x2x1
jax: 0.10.0
libtpu: 0.0.40
codegen_flags: <defaults>
</compile_context>

<pallas_src>
import jax
import jax.numpy as jnp
from jax import lax
from jax.experimental import pallas as pl
from jax.experimental.pallas import tpu as pltpu

BLOCK_SIZE = 64   # max sequence length supported by the torch module's tril buffer
N_EMBD = 128      # n_embd


def _head_kernel(x_ref, wqkv_ref, o_ref):
    # x_ref:    (b_blk, T, C)        f32 or bf16
    # wqkv_ref: (C, 3*H_pad)         [W_k | W_q | W_v], each zero-padded to H_pad lanes
    # o_ref:    (b_blk, T, H_pad)    lane-dense (H_pad is a multiple of 128)
    b_blk, t, c = x_ref.shape
    hp = wqkv_ref.shape[1] // 3

    # bf16 MXU operands when the wrapper provided bf16 inputs; f32 otherwise.
    mm_dtype = jnp.bfloat16 if x_ref.dtype == jnp.bfloat16 else jnp.float32

    # Fused QKV projection on the merged (b_blk*T, C) token matrix: one MXU matmul,
    # f32 accumulation.
    x2 = x_ref[...].reshape(b_blk * t, c)
    qkv = jnp.dot(x2, wqkv_ref[...], preferred_element_type=jnp.float32)
    qkv = qkv.reshape(b_blk, t, 3 * hp)
    # 128-lane-aligned slices (tile-aligned -> no lane relayouts).
    k = qkv[:, :, 0:hp]
    q = qkv[:, :, hp:2 * hp]
    v = qkv[:, :, 2 * hp:3 * hp]

    # Scaled scores. NOTE: scale is C**-0.5 (embedding dim) to match the torch module
    # exactly (non-standard attention scaling, but intentional).
    scale = jnp.float32(c ** -0.5)
    wei = jnp.einsum("btd,bsd->bts", q.astype(mm_dtype), k.astype(mm_dtype),
                     preferred_element_type=jnp.float32) * scale       # (b_blk,T,T)
    # (zero-padded lanes of q/k contribute exactly 0 to the contraction)

    # Causal mask with a finite sentinel (equivalent to masked_fill(tril==0,-inf)
    # after softmax, but robust to fully-padded rows).
    row = lax.broadcasted_iota(jnp.int32, (t, t), 0)
    col = lax.broadcasted_iota(jnp.int32, (t, t), 1)
    wei = jnp.where((col <= row)[None, :, :], wei, jnp.float32(-1e30))

    # Softmax statistics in f32; keep probabilities unnormalized through the value
    # matmul and fold 1/sum into the epilogue using the (otherwise idle) EUP.
    m = jnp.max(wei, axis=-1, keepdims=True)
    e = jnp.exp(wei - m)
    s = jnp.sum(e, axis=-1, keepdims=True)

    # dropout(p=0.0) is identity — skipped.

    out = jnp.einsum("bts,bsd->btd", e.astype(mm_dtype), v.astype(mm_dtype),
                     preferred_element_type=jnp.float32)               # (b_blk,T,H_pad)
    out = out * pl.reciprocal(s, approx=True)
    o_ref[...] = out.astype(o_ref.dtype)


def _choose_batch_block(B: int, target: int = 64):
    """Pick (b_blk, B_pad): big blocks to amortize per-step overhead, but keep the
    grid >= 2 steps when B > 8 so both v7x TensorCores get work."""
    if B <= 8:
        return B, B
    n_steps = max(2, pl.cdiv(B, target))
    b_blk = pl.cdiv(B, n_steps)
    b_blk = ((b_blk + 7) // 8) * 8            # sublane-friendly block leading dim
    B_pad = pl.cdiv(B, b_blk) * b_blk
    return b_blk, B_pad


def head_forward(x, w_key, w_query, w_value, *, use_bf16=True, block_b=64):
    """x: (B, T, C); w_*: (C, head_size) = nn.Linear.weight transposed.

    Returns (B, T, head_size). use_bf16=True (default) feeds all MXU matmuls with
    bf16 operands (f32 accumulation, f32 softmax); use_bf16=False keeps exact f32.
    """
    B, T, C = x.shape
    H = w_key.shape[1]
    assert C == N_EMBD and T <= BLOCK_SIZE
    out_dtype = x.dtype

    # Pad each projection to a 128-lane boundary and fuse into one (C, 3*H_pad)
    # matrix [W_k | W_q | W_v]; zero columns contribute nothing to the math.
    H_pad = max(128, ((H + 127) // 128) * 128)
    def _pad_w(w):
        return jnp.pad(w, ((0, 0), (0, H_pad - H)))
    w_qkv = jnp.concatenate([_pad_w(w_key), _pad_w(w_query), _pad_w(w_value)], axis=1)

    if use_bf16:
        x = x.astype(jnp.bfloat16)
        w_qkv = w_qkv.astype(jnp.bfloat16)

    b_blk, B_pad = _choose_batch_block(B, block_b)
    if B_pad != B:
        x = jnp.pad(x, ((0, B_pad - B), (0, 0), (0, 0)))
    grid = (B_pad // b_blk,)

    grid_spec = pltpu.PrefetchScalarGridSpec(
        num_scalar_prefetch=0,
        grid=grid,
        in_specs=[
            pl.BlockSpec((b_blk, T, C), lambda i: (i, 0, 0)),       # x batch block
            pl.BlockSpec((C, 3 * H_pad), lambda i: (0, 0)),         # fused W_qkv (resident)
        ],
        out_specs=pl.BlockSpec((b_blk, T, H_pad), lambda i: (i, 0, 0)),   # lane-dense
    )

    out = pl.pallas_call(
        _head_kernel,
        out_shape=jax.ShapeDtypeStruct((B_pad, T, H_pad), out_dtype),
        grid_spec=grid_spec,
        compiler_params=pltpu.CompilerParams(
            # batch-block axis is independent -> megacore-shardable on v7x
            dimension_semantics=("parallel",),
            # above the v5e(16MiB)/v6e-v7x(32MiB) scoped defaults, with headroom
            # under v7x's 64 MiB physical VMEM
            vmem_limit_bytes=48 * 1024 * 1024,
        ),
    )(x, w_qkv)

    # Drop batch padding and the zero-padded head lanes (free XLA slice).
    return out[:B, :, :H]


def _reference(x, w_key, w_query, w_value):
    """Pure-JAX reference reproducing the PyTorch forward (f32)."""
    B, T, C = x.shape
    k = x @ w_key
    q = x @ w_query
    v = x @ w_value
    wei = (q @ jnp.swapaxes(k, -2, -1)) * (C ** -0.5)
    tril = jnp.tril(jnp.ones((T, T), dtype=bool))
    wei = jnp.where(tril, wei, -jnp.inf)
    wei = jax.nn.softmax(wei, axis=-1)
    return wei @ v


if __name__ == "__main__":
    key = jax.random.PRNGKey(0)
    C = N_EMBD
    head_size = 32

    # --- small shape: B=2, T=16 -------------------------------------------------
    B, T = 2, 16
    k_x, k_k, k_q, k_v = jax.random.split(key, 4)
    x = jax.random.normal(k_x, (B, T, C), dtype=jnp.float32)
    # deterministic "Linear(no bias)" weights, stored as (in_features, out_features)
    w_key = jax.random.normal(k_k, (C, head_size), dtype=jnp.float32) * (C ** -0.5)
    w_query = jax.random.normal(k_q, (C, head_size), dtype=jnp.float32) * (C ** -0.5)
    w_value = jax.random.normal(k_v, (C, head_size), dtype=jnp.float32) * (C ** -0.5)
    ref = _reference(x, w_key, w_query, w_value)

    # default bf16-operand path (looser tolerance: bf16 MXU operands, approx reciprocal)
    out_bf16 = jax.block_until_ready(head_forward(x, w_key, w_query, w_value))
    assert out_bf16.shape == (B, T, head_size)
    assert jnp.allclose(out_bf16, ref, atol=3e-2, rtol=3e-2), "bf16 path mismatch"

    # exact-f32 path (only the EUP approximate reciprocal deviates, ~1e-4 rel)
    out_f32 = jax.block_until_ready(
        head_forward(x, w_key, w_query, w_value, use_bf16=False))
    assert jnp.allclose(out_f32, ref, atol=2e-3, rtol=2e-3), "f32 path mismatch"

    # --- awkward batch + full block_size: exercises padding and the 2-step grid --
    B2, T2 = 10, 64
    k_x2 = jax.random.split(k_x)[0]
    x2 = jax.random.normal(k_x2, (B2, T2, C), dtype=jnp.float32)
    ref2 = _reference(x2, w_key, w_query, w_value)
    out2 = jax.block_until_ready(head_forward(x2, w_key, w_query, w_value))
    assert out2.shape == (B2, T2, head_size)
    assert jnp.allclose(out2, ref2, atol=3e-2, rtol=3e-2), "padded-batch path mismatch"

    print("KERNEL_OK")
</pallas_src>

<mosaic_0001>
module attributes {stable_mosaic.version = 11 : i64} {
  func.func @_head_kernel(%arg0: i32, %arg1: memref<2x16x128xbf16, #tpu.memory_space<vmem>>, %arg2: memref<128x384xbf16, #tpu.memory_space<vmem>>, %arg3: memref<2x16x128xf32, #tpu.memory_space<vmem>>) attributes {dimension_semantics = [#tpu.dimension_semantics<parallel>], iteration_bounds = array<i64: 1>, scalar_prefetch = 0 : i64, scratch_operands = 0 : i64, tpu.core_type = #tpu.core_type<tc>, window_params = [{transform_indices = @transform_0, window_bounds = array<i64: 2, 16, 128>}, {pipeline_mode = #tpu.pipeline_mode<synchronous>, transform_indices = @transform_1, window_bounds = array<i64: 128, 384>}, {transform_indices = @transform_2, window_bounds = array<i64: 2, 16, 128>}]} {
    %c0 = arith.constant 0 : index
    %c0_0 = arith.constant 0 : index
    %c0_1 = arith.constant 0 : index
    %0 = vector.load %arg1[%c0, %c0_0, %c0_1] : memref<2x16x128xbf16, #tpu.memory_space<vmem>>, vector<2x16x128xbf16>
    %1 = vector.shape_cast %0 : vector<2x16x128xbf16> to vector<32x128xbf16>
    %c0_2 = arith.constant 0 : index
    %c0_3 = arith.constant 0 : index
    %2 = vector.load %arg2[%c0_2, %c0_3] : memref<128x384xbf16, #tpu.memory_space<vmem>>, vector<128x384xbf16>
    %cst = arith.constant dense<0.000000e+00> : vector<32x384xf32>
    %3 = tpu.matmul %1, %2, %cst {dimension_numbers = #tpu.dot_dimension_numbers<[1], [0], [0], [1], [0, 0, 1, 1], [], []>} : vector<32x128xbf16>, vector<128x384xbf16>, vector<32x384xf32> -> vector<32x384xf32>
    %4 = vector.shape_cast %3 : vector<32x384xf32> to vector<2x16x384xf32>
    %5 = vector.extract_strided_slice %4 {offsets = [0, 0, 0], sizes = [2, 16, 128], strides = [1, 1, 1]} : vector<2x16x384xf32> to vector<2x16x128xf32>
    %6 = vector.extract_strided_slice %4 {offsets = [0, 0, 128], sizes = [2, 16, 128], strides = [1, 1, 1]} : vector<2x16x384xf32> to vector<2x16x128xf32>
    %7 = vector.extract_strided_slice %4 {offsets = [0, 0, 256], sizes = [2, 16, 128], strides = [1, 1, 1]} : vector<2x16x384xf32> to vector<2x16x128xf32>
    %8 = arith.truncf %6 : vector<2x16x128xf32> to vector<2x16x128xbf16>
    %9 = arith.truncf %5 : vector<2x16x128xf32> to vector<2x16x128xbf16>
    "tpu.trace_start"() <{level = 10 : i32, message = "btd,bsd->bts"}> : () -> ()
    %cst_4 = arith.constant dense<0.000000e+00> : vector<2x16x16xf32>
    %10 = tpu.matmul %8, %9, %cst_4 {dimension_numbers = #tpu.dot_dimension_numbers<[2], [2], [1], [1], [0, 0, 0, 1, 1, 1], [0], [0]>} : vector<2x16x128xbf16>, vector<2x16x128xbf16>, vector<2x16x16xf32> -> vector<2x16x16xf32>
    "tpu.trace_stop"() : () -> ()
    %cst_5 = arith.constant 0.0883883461 : f32
    %11 = vector.broadcast %cst_5 : f32 to vector<2x16x16xf32>
    %12 = arith.mulf %10, %11 : vector<2x16x16xf32>
    %13 = tpu.iota {dimensions = array<i32: 0>} : vector<16x16xi32>
    %14 = tpu.iota {dimensions = array<i32: 1>} : vector<16x16xi32>
    %15 = arith.cmpi sle, %14, %13 : vector<16x16xi32>
    %16 = vector.shape_cast %15 : vector<16x16xi1> to vector<1x16x16xi1>
    %cst_6 = arith.constant -1.000000e+30 : f32
    %17 = vector.shape_cast %16 : vector<1x16x16xi1> to vector<1x16x16xi1>
    %18 = vector.broadcast %17 : vector<1x16x16xi1> to vector<2x16x16xi1>
    %19 = vector.broadcast %cst_6 : f32 to vector<2x16x16xf32>
    %20 = arith.select %18, %12, %19 : vector<2x16x16xi1>, vector<2x16x16xf32>
    %cst_7 = arith.constant dense<0xFF800000> : vector<2x16xf32>
    %21 = vector.multi_reduction <maximumf>, %20, %cst_7 [2] : vector<2x16x16xf32> to vector<2x16xf32>
    %22 = vector.shape_cast %21 : vector<2x16xf32> to vector<2x16x1xf32>
    %23 = vector.broadcast %22 : vector<2x16x1xf32> to vector<2x16x16xf32>
    %24 = arith.subf %20, %23 : vector<2x16x16xf32>
    %25 = math.exp %24 : vector<2x16x16xf32>
    %cst_8 = arith.constant dense<0.000000e+00> : vector<2x16xf32>
    %26 = vector.multi_reduction <add>, %25, %cst_8 [2] : vector<2x16x16xf32> to vector<2x16xf32>
    %27 = vector.shape_cast %26 : vector<2x16xf32> to vector<2x16x1xf32>
    %28 = arith.truncf %25 : vector<2x16x16xf32> to vector<2x16x16xbf16>
    %29 = arith.truncf %7 : vector<2x16x128xf32> to vector<2x16x128xbf16>
    "tpu.trace_start"() <{level = 10 : i32, message = "bts,bsd->btd"}> : () -> ()
    %cst_9 = arith.constant dense<0.000000e+00> : vector<2x16x128xf32>
    %30 = tpu.matmul %28, %29, %cst_9 {dimension_numbers = #tpu.dot_dimension_numbers<[2], [1], [1], [2], [0, 0, 0, 1, 1, 2], [0], [0]>} : vector<2x16x16xbf16>, vector<2x16x128xbf16>, vector<2x16x128xf32> -> vector<2x16x128xf32>
    "tpu.trace_stop"() : () -> ()
    %31 = tpu.reciprocal %27 {approx = true} : vector<2x16x1xf32> -> vector<2x16x1xf32>
    %32 = vector.broadcast %31 : vector<2x16x1xf32> to vector<2x16x128xf32>
    %33 = arith.mulf %30, %32 : vector<2x16x128xf32>
    %c0_10 = arith.constant 0 : index
    %c0_11 = arith.constant 0 : index
    %c0_12 = arith.constant 0 : index
    %34 = vector.load %arg3[%c0_10, %c0_11, %c0_12] : memref<2x16x128xf32, #tpu.memory_space<vmem>>, vector<2x16x128xf32>
    tpu.vector_store %arg3[%c0_10, %c0_11, %c0_12], %33 {strides = array<i32>} : memref<2x16x128xf32, #tpu.memory_space<vmem>>, vector<2x16x128xf32>,
    return
  }
  func.func @transform_0(%arg0: i32) -> (i32, i32, i32) {
    %c0_i32 = arith.constant 0 : i32
    %c0_i32_0 = arith.constant 0 : i32
    %c0_i32_1 = arith.constant 0 : i32
    return %arg0, %c0_i32, %c0_i32_0 : i32, i32, i32
  }
  func.func @transform_1(%arg0: i32) -> (i32, i32) {
    %c0_i32 = arith.constant 0 : i32
    %c0_i32_0 = arith.constant 0 : i32
    %c0_i32_1 = arith.constant 0 : i32
    return %c0_i32, %c0_i32_0 : i32, i32
  }
  func.func @transform_2(%arg0: i32) -> (i32, i32, i32) {
    %c0_i32 = arith.constant 0 : i32
    %c0_i32_0 = arith.constant 0 : i32
    %c0_i32_1 = arith.constant 0 : i32
    return %arg0, %c0_i32, %c0_i32_0 : i32, i32, i32
  }
}

</mosaic_0001>

<llo_original>
// kernel: tpu_custom_call.1
$region0: #{tpu_custom_call.1}
  #allocation0 [shape = 'u32[]', space=smem, size = 0x4, offset = 0x4, fixed_abs, tag = 'smem constant byte address 0x4 - core index']
  #allocation1 [shape = 'u32[144,128]{1,0:T(1,128)}', space=vmem, size = 0x12000, scoped, tag = 'internal scratch']
  %s0 = inlined_call_operand.hbm [shape: bf16[2,16,128], index: 0, kind: input, shape index: {}]
  %s1 = inlined_call_operand.hbm [shape: bf16[128,384], index: 1, kind: input, shape index: {}]
  %s2 = inlined_call_operand.hbm [shape: f32[2,16,128], index: 2, kind: output, shape index: {}]
  %s3 = sld [smem:[#allocation0]]
  $region26: #{tpu_custom_call.1} parent=0
    _
  %s5 = ssub.s32 1, %s3
  %s6 = scalar_select 0, %s5, %s3
  $region1: #{tpu_custom_call.1} parent=0
    #allocation2 [shape = 'u8[8192]{0}', space=vmem, size = 0x2000, scoped, tag = 'input window, operand 0, single buffered']
    #allocation3 [shape = 's32[1]{0}', space=sflag, size = 0x4, scoped, tag = 'scoped memory for tpu_custom_call.1']
    #allocation4 [shape = 's32[1]{0}', space=sflag, size = 0x4, scoped, tag = 'scoped memory for tpu_custom_call.1']
    #allocation5 [shape = 'u8[98304]{0}', space=vmem, size = 0x18000, scoped, tag = 'input window, operand 1, single buffered']
    #allocation6 [shape = 's32[1]{0}', space=sflag, size = 0x4, scoped, tag = 'scoped memory for tpu_custom_call.1']
    #allocation7 [shape = 'u8[16384]{0}', space=vmem, size = 0x4000, scoped, tag = 'output window, operand 0, single buffered']
    %7 = vsyncpa [#allocation3], 0
    %8 = vsyncpa [#allocation6], 0
    %9 = vsyncpa [#allocation4], 0
    // Predicated region
    $region2: #{tpu_custom_call.1} parent=1 // pred_check
      _
    $region3: #{tpu_custom_call.1} parent=1 // pred_check_branch
      %11 = sbr.rel (0) target = $region5
    $region4: #{tpu_custom_call.1} parent=1 // pred_region
      %s13 = ssub.s32 256, 256
      %14 = vsyncadd [#allocation3], %s13
      %s15 = sshll.u32 [#allocation2], 4
      %s16 = int_to_ptr.vmem [resolvable:$true] %s15
      %21 = dma.hbm_to_vmem [thread:$0]  %s0, 256, %s16, [#allocation3], 64, 64, 4
    $region5: #{tpu_custom_call.1} parent=1 // pred_fallthru
      _
    // Predicated region
    $region6: #{tpu_custom_call.1} parent=1 // pred_check
      _
    $region7: #{tpu_custom_call.1} parent=1 // pred_check_branch
      %23 = sbr.rel (0) target = $region9
    $region8: #{tpu_custom_call.1} parent=1 // pred_region
      %s25 = ssub.s32 3072, 3072
      %26 = vsyncadd [#allocation6], %s25
      %s27 = sshll.u32 [#allocation5], 4
      %s28 = int_to_ptr.vmem [resolvable:$true] %s27
      %33 = dma.hbm_to_vmem [thread:$0]  %s1, 3072, %s28, [#allocation6], 192, 192, 12
    $region9: #{tpu_custom_call.1} parent=1 // pred_fallthru
      _
    // Predicated region
    $region10: #{tpu_custom_call.1} parent=1 // pred_check
      _
    $region11: #{tpu_custom_call.1} parent=1 // pred_check_branch
      %35 = sbr.rel (0) target = $region13
    $region12: #{tpu_custom_call.1} parent=1 // pred_region
      %36 = dma.done [#allocation3], 256
    $region13: #{tpu_custom_call.1} parent=1 // pred_fallthru
      _
    // Predicated region
    $region14: #{tpu_custom_call.1} parent=1 // pred_check
      _
    $region15: #{tpu_custom_call.1} parent=1 // pred_check_branch
      %38 = sbr.rel (0) target = $region17
    $region16: #{tpu_custom_call.1} parent=1 // pred_region
      %39 = dma.done [#allocation6], 3072
    $region17: #{tpu_custom_call.1} parent=1 // pred_fallthru
      _
    %v41 = vld [vmem:[#allocation2] sm:$0xf]
    %v42 = vld [vmem:[#allocation2 + $0x4] sm:$0xf]
    %v43 = vld [vmem:[#allocation2 + $0x8] sm:$0xf]
    %v44 = vld [vmem:[#allocation2 + $0xc] sm:$0xf]
    %v45 = vld [vmem:[#allocation5] sm:$0xff]
    %v46 = vld [vmem:[#allocation5 + $0x8] sm:$0xf]
    %v47 = vld [vmem:[#allocation5 + $0xc] sm:$0xff]
    %v48 = vld [vmem:[#allocation5 + $0x14] sm:$0xf]
    %v49 = vld [vmem:[#allocation5 + $0x18] sm:$0xff]
    %v50 = vld [vmem:[#allocation5 + $0x20] sm:$0xf]
    %v51 = vld [vmem:[#allocation5 + $0x24] sm:$0xff]
    %v52 = vld [vmem:[#allocation5 + $0x2c] sm:$0xf]
    %v53 = vld [vmem:[#allocation5 + $0x30] sm:$0xff]
    %v54 = vld [vmem:[#allocation5 + $0x38] sm:$0xf]
    %v55 = vld [vmem:[#allocation5 + $0x3c] sm:$0xff]
    %v56 = vld [vmem:[#allocation5 + $0x44] sm:$0xf]
    %v57 = vld [vmem:[#allocation5 + $0x48] sm:$0xff]
    %v58 = vld [vmem:[#allocation5 + $0x50] sm:$0xf]
    %v59 = vld [vmem:[#allocation5 + $0x54] sm:$0xff]
    %v60 = vld [vmem:[#allocation5 + $0x5c] sm:$0xf]
    %v61 = vld [vmem:[#allocation5 + $0x60] sm:$0xff]
    %v62 = vld [vmem:[#allocation5 + $0x68] sm:$0xf]
    %v63 = vld [vmem:[#allocation5 + $0x6c] sm:$0xff]
    %v64 = vld [vmem:[#allocation5 + $0x74] sm:$0xf]
    %v65 = vld [vmem:[#allocation5 + $0x78] sm:$0xff]
    %v66 = vld [vmem:[#allocation5 + $0x80] sm:$0xf]
    %v67 = vld [vmem:[#allocation5 + $0x84] sm:$0xff]
    %v68 = vld [vmem:[#allocation5 + $0x8c] sm:$0xf]
    %v69 = vld [vmem:[#allocation5 + $0x90] sm:$0xff]
    %v70 = vld [vmem:[#allocation5 + $0x98] sm:$0xf]
    %v71 = vld [vmem:[#allocation5 + $0x9c] sm:$0xff]
    %v72 = vld [vmem:[#allocation5 + $0xa4] sm:$0xf]
    %v73 = vld [vmem:[#allocation5 + $0xa8] sm:$0xff]
    %v74 = vld [vmem:[#allocation5 + $0xb0] sm:$0xf]
    %v75 = vld [vmem:[#allocation5 + $0xb4] sm:$0xff]
    %v76 = vld [vmem:[#allocation5 + $0xbc] sm:$0xf]
    %v81 = vunpack.c.l.b16 %v41
    %v82 = vunpack.c.l.b16 %v42
    %v83 = vunpack.c.l.b16 %v43
    %v84 = vunpack.c.l.b16 %v44
    %v85 = vpack.c.b16 %v82, %v81
    %v86 = vpack.c.b16 %v84, %v83
    %v121 = vunpack.c.l.b16 %v45
    %v122 = vunpack.c.h.b16 %v45
    %v123 = vunpack.c.l.b16 %v46
    %v124 = vunpack.c.l.b16 %v47
    %v125 = vunpack.c.h.b16 %v47
    %v126 = vunpack.c.l.b16 %v48
    %v127 = vunpack.c.l.b16 %v49
    %v128 = vunpack.c.h.b16 %v49
    %v129 = vunpack.c.l.b16 %v50
    %v130 = vunpack.c.l.b16 %v51
    %v131 = vunpack.c.h.b16 %v51
    %v132 = vunpack.c.l.b16 %v52
    %v133 = vunpack.c.l.b16 %v53
    %v134 = vunpack.c.h.b16 %v53
    %v135 = vunpack.c.l.b16 %v54
    %v136 = vunpack.c.l.b16 %v55
    %v137 = vunpack.c.h.b16 %v55
    %v138 = vunpack.c.l.b16 %v56
    %v139 = vunpack.c.l.b16 %v57
    %v140 = vunpack.c.h.b16 %v57
    %v141 = vunpack.c.l.b16 %v58
    %v142 = vunpack.c.l.b16 %v59
    %v143 = vunpack.c.h.b16 %v59
    %v144 = vunpack.c.l.b16 %v60
    %v145 = vunpack.c.l.b16 %v61
    %v146 = vunpack.c.h.b16 %v61
    %v147 = vunpack.c.l.b16 %v62
    %v148 = vunpack.c.l.b16 %v63
    %v149 = vunpack.c.h.b16 %v63
    %v150 = vunpack.c.l.b16 %v64
    %v151 = vunpack.c.l.b16 %v65
    %v152 = vunpack.c.h.b16 %v65
    %v153 = vunpack.c.l.b16 %v66
    %v154 = vunpack.c.l.b16 %v67
    %v155 = vunpack.c.h.b16 %v67
    %v156 = vunpack.c.l.b16 %v68
    %v157 = vunpack.c.l.b16 %v69
    %v158 = vunpack.c.h.b16 %v69
    %v159 = vunpack.c.l.b16 %v70
    %v160 = vunpack.c.l.b16 %v71
    %v161 = vunpack.c.h.b16 %v71
    %v162 = vunpack.c.l.b16 %v72
    %v163 = vunpack.c.l.b16 %v73
    %v164 = vunpack.c.h.b16 %v73
    %v165 = vunpack.c.l.b16 %v74
    %v166 = vunpack.c.l.b16 %v75
    %v167 = vunpack.c.h.b16 %v75
    %v168 = vunpack.c.l.b16 %v76
    %v169 = vpack.c.b16 %v124, %v121
    %v170 = vpack.c.b16 %v125, %v122
    %v171 = vpack.c.b16 %v126, %v123
    %v172 = vpack.c.b16 %v130, %v127
    %v173 = vpack.c.b16 %v131, %v128
    %v174 = vpack.c.b16 %v132, %v129
    %v175 = vpack.c.b16 %v136, %v133
    %v176 = vpack.c.b16 %v137, %v134
    %v177 = vpack.c.b16 %v138, %v135
    %v178 = vpack.c.b16 %v142, %v139
    %v179 = vpack.c.b16 %v143, %v140
    %v180 = vpack.c.b16 %v144, %v141
    %v181 = vpack.c.b16 %v148, %v145
    %v182 = vpack.c.b16 %v149, %v146
    %v183 = vpack.c.b16 %v150, %v147
    %v184 = vpack.c.b16 %v154, %v151
    %v185 = vpack.c.b16 %v155, %v152
    %v186 = vpack.c.b16 %v156, %v153
    %v187 = vpack.c.b16 %v160, %v157
    %v188 = vpack.c.b16 %v161, %v158
    %v189 = vpack.c.b16 %v162, %v159
    %v190 = vpack.c.b16 %v166, %v163
    %v191 = vpack.c.b16 %v167, %v164
    %v192 = vpack.c.b16 %v168, %v165
    %217 = vmatprep.subr.bf16.mxu0 %v191
    %218 = vmatpush1.bf16.msra.mxu0 %v190
    %219 = vmatprep.subr.bf16.mxu0 %v188
    %220 = vmatpush1.bf16.msra.mxu0 %v187
    %221 = vmatprep.subr.bf16.mxu0 %v185
    %222 = vmatpush1.bf16.msra.mxu0 %v184
    %223 = vmatprep.subr.bf16.mxu0 %v182
    %224 = vmatpush1.bf16.msra.mxu0 %v181
    %225 = vmatprep.subr.bf16.mxu0 %v179
    %226 = vmatpush1.bf16.msra.mxu0 %v178
    %227 = vmatprep.subr.bf16.mxu0 %v176
    %228 = vmatpush1.bf16.msra.mxu0 %v175
    %229 = vmatprep.subr.bf16.mxu0 %v173
    %230 = vmatpush1.bf16.msra.mxu0 %v172
    %231 = vmatprep.subr.bf16.mxu0 %v170
    %232 = vmatpush1.bf16.msra.mxu0 %v169
    %233 = vmatprep.subr.bf16.mxu0 0
    %234 = vmatpush2.bf16.msra.mxu0 0
    %235 = vmatprep.subr.bf16.mxu0 0
    %236 = vmatpush2.bf16.msra.mxu0 0
    %237 = vmatprep.subr.bf16.mxu0 0
    %238 = vmatpush2.bf16.msra.mxu0 0
    %239 = vmatprep.subr.bf16.mxu0 0
    %240 = vmatpush2.bf16.msra.mxu0 0
    %241 = vmatprep.subr.bf16.mxu0 0
    %242 = vmatpush2.bf16.msra.mxu0 0
    %243 = vmatprep.subr.bf16.mxu0 0
    %244 = vmatpush2.bf16.msra.mxu0 0
    %245 = vmatprep.subr.bf16.mxu0 0
    %246 = vmatpush2.bf16.msra.mxu0 0
    %247 = vmatprep.subr.bf16.mxu0 0
    %248 = vmatpush2.bf16.msra.mxu0 0
    %249 = vmatprep.mubr.bf16.mxu0 0
    %250 = vmatmul.mubr.bf16.gmra.mxu0 %v85
    %v251 = vpop.f32.mrf.mxu0
    %v252 = vadd.f32 0.0, %v251
    %v253 = vpop.f32.mrf.mxu0
    %v254 = vadd.f32 0.0, %v253
    %v255 = vpop.f32.mrf.mxu0
    %v256 = vadd.f32 0.0, %v255
    %v257 = vpop.f32.mrf.mxu0
    %v258 = vadd.f32 0.0, %v257
    %259 = vmatprep.mubr.bf16.mxu0 0
    %260 = vmatmul.mubr.bf16.gmra.mxu0 %v86
    %v261 = vpop.f32.mrf.mxu0
    %v262 = vadd.f32 0.0, %v261
    %v263 = vpop.f32.mrf.mxu0
    %v264 = vadd.f32 0.0, %v263
    %v265 = vpop.f32.mrf.mxu0
    %v266 = vadd.f32 0.0, %v265
    %v267 = vpop.f32.mrf.mxu0
    %v268 = vadd.f32 0.0, %v267
    %269 = vdwg.mxu0
    %270 = vmatprep.subr.bf16.mxu0 0
    %271 = vmatpush1.bf16.msra.mxu0 %v192
    %272 = vmatprep.subr.bf16.mxu0 0
    %273 = vmatpush1.bf16.msra.mxu0 %v189
    %274 = vmatprep.subr.bf16.mxu0 0
    %275 = vmatpush1.bf16.msra.mxu0 %v186
    %276 = vmatprep.subr.bf16.mxu0 0
    %277 = vmatpush1.bf16.msra.mxu0 %v183
    %278 = vmatprep.subr.bf16.mxu0 0
    %279 = vmatpush1.bf16.msra.mxu0 %v180
    %280 = vmatprep.subr.bf16.mxu0 0
    %281 = vmatpush1.bf16.msra.mxu0 %v177
    %282 = vmatprep.subr.bf16.mxu0 0
    %283 = vmatpush1.bf16.msra.mxu0 %v174
    %284 = vmatprep.subr.bf16.mxu0 0
    %285 = vmatpush1.bf16.msra.mxu0 %v171
    %286 = vmatprep.subr.bf16.mxu0 0
    %287 = vmatpush2.bf16.msra.mxu0 0
    %288 = vmatprep.subr.bf16.mxu0 0
    %289 = vmatpush2.bf16.msra.mxu0 0
    %290 = vmatprep.subr.bf16.mxu0 0
    %291 = vmatpush2.bf16.msra.mxu0 0
    %292 = vmatprep.subr.bf16.mxu0 0
    %293 = vmatpush2.bf16.msra.mxu0 0
    %294 = vmatprep.subr.bf16.mxu0 0
    %295 = vmatpush2.bf16.msra.mxu0 0
    %296 = vmatprep.subr.bf16.mxu0 0
    %297 = vmatpush2.bf16.msra.mxu0 0
    %298 = vmatprep.subr.bf16.mxu0 0
    %299 = vmatpush2.bf16.msra.mxu0 0
    %300 = vmatprep.subr.bf16.mxu0 0
    %301 = vmatpush2.bf16.msra.mxu0 0
    %302 = vmatprep.mubr.bf16.mxu0 0
    %303 = vmatmul.mubr.bf16.gmra.mxu0 %v85
    %v304 = vpop.f32.mrf.mxu0
    %v305 = vadd.f32 0.0, %v304
    %v306 = vpop.f32.mrf.mxu0
    %v307 = vpop.f32.mrf.mxu0
    %v308 = vadd.f32 0.0, %v307
    %v309 = vpop.f32.mrf.mxu0
    %310 = vmatprep.mubr.bf16.mxu0 0
    %311 = vmatmul.mubr.bf16.gmra.mxu0 %v86
    %v312 = vpop.f32.mrf.mxu0
    %v313 = vadd.f32 0.0, %v312
    %v314 = vpop.f32.mrf.mxu0
    %v315 = vpop.f32.mrf.mxu0
    %v316 = vadd.f32 0.0, %v315
    %v317 = vpop.f32.mrf.mxu0
    %318 = vdwg.mxu0
    %v319 = vpack.c.bf16 %v258, %v254
    %v320 = vpack.c.bf16 %v268, %v264
    %v321 = vpack.c.bf16 %v256, %v252
    %v322 = vpack.c.bf16 %v266, %v262
    %323 = vmatprep.subr.bf16.mxu0 0
    %324 = vmatpush1.bf16.xpose.msra.mxu0 0
    %325 = vmatprep.subr.bf16.mxu0 0
    %326 = vmatpush1.bf16.xpose.msra.mxu0 0
    %327 = vmatprep.subr.bf16.mxu0 0
    %328 = vmatpush1.bf16.xpose.msra.mxu0 0
    %329 = vmatprep.subr.bf16.mxu0 0
    %330 = vmatpush1.bf16.xpose.msra.mxu0 0
    %331 = vmatprep.subr.bf16.mxu0 0
    %332 = vmatpush1.bf16.xpose.msra.mxu0 0
    %333 = vmatprep.subr.bf16.mxu0 0
    %334 = vmatpush1.bf16.xpose.msra.mxu0 0
    %335 = vmatprep.subr.bf16.mxu0 0
    %336 = vmatpush1.bf16.xpose.msra.mxu0 0
    %337 = vmatprep.subr.bf16.mxu0 0
    %338 = vmatpush1.bf16.xpose.msra.mxu0 %v321
    %339 = vmatprep.subr.bf16.mxu0 0
    %340 = vmatpush2.bf16.xpose.msra.mxu0 0
    %341 = vmatprep.subr.bf16.mxu0 0
    %342 = vmatpush2.bf16.xpose.msra.mxu0 0
    %343 = vmatprep.subr.bf16.mxu0 0
    %344 = vmatpush2.bf16.xpose.msra.mxu0 0
    %345 = vmatprep.subr.bf16.mxu0 0
    %346 = vmatpush2.bf16.xpose.msra.mxu0 0
    %347 = vmatprep.subr.bf16.mxu0 0
    %348 = vmatpush2.bf16.xpose.msra.mxu0 0
    %349 = vmatprep.subr.bf16.mxu0 0
    %350 = vmatpush2.bf16.xpose.msra.mxu0 0
    %351 = vmatprep.subr.bf16.mxu0 0
    %352 = vmatpush2.bf16.xpose.msra.mxu0 0
    %353 = vmatprep.subr.bf16.mxu0 0
    %354 = vmatpush2.bf16.xpose.msra.mxu0 0
    %355 = vmatprep.mubr.bf16.mxu0 0
    %356 = vmatmul.mubr.bf16.gmra.mxu0 %v319
    %v357 = vpop.f32.mrf.mxu0
    %v358 = vadd.f32 0.0, %v357
    %v359 = vpop.f32.mrf.mxu0
    %v360 = vpop.f32.mrf.mxu0
    %v361 = vadd.f32 0.0, %v360
    %v362 = vpop.f32.mrf.mxu0
    %363 = vdwg.mxu0
    %364 = vmatprep.subr.bf16.mxu0 0
    %365 = vmatpush1.bf16.xpose.msra.mxu0 0
    %366 = vmatprep.subr.bf16.mxu0 0
    %367 = vmatpush1.bf16.xpose.msra.mxu0 0
    %368 = vmatprep.subr.bf16.mxu0 0
    %369 = vmatpush1.bf16.xpose.msra.mxu0 0
    %370 = vmatprep.subr.bf16.mxu0 0
    %371 = vmatpush1.bf16.xpose.msra.mxu0 0
    %372 = vmatprep.subr.bf16.mxu0 0
    %373 = vmatpush1.bf16.xpose.msra.mxu0 0
    %374 = vmatprep.subr.bf16.mxu0 0
    %375 = vmatpush1.bf16.xpose.msra.mxu0 0
    %376 = vmatprep.subr.bf16.mxu0 0
    %377 = vmatpush1.bf16.xpose.msra.mxu0 0
    %378 = vmatprep.subr.bf16.mxu0 0
    %379 = vmatpush1.bf16.xpose.msra.mxu0 %v322
    %380 = vmatprep.subr.bf16.mxu0 0
    %381 = vmatpush2.bf16.xpose.msra.mxu0 0
    %382 = vmatprep.subr.bf16.mxu0 0
    %383 = vmatpush2.bf16.xpose.msra.mxu0 0
    %384 = vmatprep.subr.bf16.mxu0 0
    %385 = vmatpush2.bf16.xpose.msra.mxu0 0
    %386 = vmatprep.subr.bf16.mxu0 0
    %387 = vmatpush2.bf16.xpose.msra.mxu0 0
    %388 = vmatprep.subr.bf16.mxu0 0
    %389 = vmatpush2.bf16.xpose.msra.mxu0 0
    %390 = vmatprep.subr.bf16.mxu0 0
    %391 = vmatpush2.bf16.xpose.msra.mxu0 0
    %392 = vmatprep.subr.bf16.mxu0 0
    %393 = vmatpush2.bf16.xpose.msra.mxu0 0
    %394 = vmatprep.subr.bf16.mxu0 0
    %395 = vmatpush2.bf16.xpose.msra.mxu0 0
    %396 = vmatprep.mubr.bf16.mxu0 0
    %397 = vmatmul.mubr.bf16.gmra.mxu0 %v320
    %v398 = vpop.f32.mrf.mxu0
    %v399 = vadd.f32 0.0, %v398
    %v400 = vpop.f32.mrf.mxu0
    %v401 = vpop.f32.mrf.mxu0
    %v402 = vadd.f32 0.0, %v401
    %v403 = vpop.f32.mrf.mxu0
    %404 = vdwg.mxu0
    %v405 = vmul.f32 %v358, 0.088388346
    %v406 = vmul.f32 %v361, 0.088388346
    %v407 = vmul.f32 %v399, 0.088388346
    %v408 = vmul.f32 %v402, 0.088388346
    %v409 = vlaneseq
    %v410 = vshrl.u32 %v409, 7
    %v411 = vadd.s32 %v410, 8
    %v412 = vlaneseq
    %v413 = vand.u32 %v412, 127
    %vm414 = vcmp.le.s32.totalorder %v413, %v410
    %vm415 = vcmp.le.s32.totalorder %v413, %v411
    %v416 = vsel %vm414, 1, 0
    %v417 = vsel %vm415, 1, 0
    %vm418 = vcmp.eq.s32.totalorder %v416, 1
    %vm419 = vcmp.eq.s32.totalorder %v417, 1
    %v420 = vsel %vm418, %v405, -1e+30
    %v421 = vsel %vm419, %v406, -1e+30
    %v422 = vsel %vm418, %v407, -1e+30
    %v423 = vsel %vm419, %v408, -1e+30
    %vm424 = vcmask 130048
    %v425 = vsel %vm424, %v420, -inf
    %426 = vmax.xlane.f32.xlu0 %v425
    %v427 = vpop.xlane.xlu0 %426
    %v428 = vsel %vm424, %v421, -inf
    %429 = vmax.xlane.f32.xlu0 %v428
    %v430 = vpop.xlane.xlu0 %429
    %v431 = vsel %vm424, %v422, -inf
    %432 = vmax.xlane.f32.xlu0 %v431
    %v433 = vpop.xlane.xlu0 %432
    %v434 = vsel %vm424, %v423, -inf
    %435 = vmax.xlane.f32.xlu0 %v434
    %v436 = vpop.xlane.xlu0 %435
    %v437 = vsub.f32 %v420, %v427
    %v438 = vsub.f32 %v421, %v430
    %v439 = vsub.f32 %v422, %v433
    %v440 = vsub.f32 %v423, %v436
    %v441 = vmul.f32 %v437, 1.442695
    %v442 = vpow.pop %v441
    %v443 = vmul.f32 %v438, 1.442695
    %v444 = vpow.pop %v443
    %v445 = vmul.f32 %v439, 1.442695
    %v446 = vpow.pop %v445
    %v447 = vmul.f32 %v440, 1.442695
    %v448 = vpow.pop %v447
    %v449 = vsel %vm424, %v442, 0.0
    %450 = vadd.xlane.f32.xlu0 %v449
    %v451 = vpop.xlane.xlu0 %450
    %v452 = vsel %vm424, %v444, 0.0
    %453 = vadd.xlane.f32.xlu0 %v452
    %v454 = vpop.xlane.xlu0 %453
    %v455 = vsel %vm424, %v446, 0.0
    %456 = vadd.xlane.f32.xlu0 %v455
    %v457 = vpop.xlane.xlu0 %456
    %v458 = vsel %vm424, %v448, 0.0
    %459 = vadd.xlane.f32.xlu0 %v458
    %v460 = vpop.xlane.xlu0 %459
    %v461 = vpack.c.bf16 %v444, %v442
    %v462 = vpack.c.bf16 %v448, %v446
    %v463 = vpack.c.bf16 %v308, %v305
    %v464 = vpack.c.bf16 %v316, %v313
    %v466 = vsel %vm424, %v461, 0
    %468 = vmatprep.subr.bf16.mxu0 0
    %469 = vmatpush1.bf16.msra.mxu0 0
    %470 = vmatprep.subr.bf16.mxu0 0
    %471 = vmatpush1.bf16.msra.mxu0 0
    %472 = vmatprep.subr.bf16.mxu0 0
    %473 = vmatpush1.bf16.msra.mxu0 0
    %474 = vmatprep.subr.bf16.mxu0 0
    %475 = vmatpush1.bf16.msra.mxu0 0
    %476 = vmatprep.subr.bf16.mxu0 0
    %477 = vmatpush1.bf16.msra.mxu0 0
    %478 = vmatprep.subr.bf16.mxu0 0
    %479 = vmatpush1.bf16.msra.mxu0 0
    %480 = vmatprep.subr.bf16.mxu0 0
    %481 = vmatpush1.bf16.msra.mxu0 0
    %482 = vmatprep.subr.bf16.mxu0 0
    %483 = vmatpush1.bf16.msra.mxu0 %v463
    %484 = vmatprep.subr.bf16.mxu0 0
    %485 = vmatpush2.bf16.msra.mxu0 0
    %486 = vmatprep.subr.bf16.mxu0 0
    %487 = vmatpush2.bf16.msra.mxu0 0
    %488 = vmatprep.subr.bf16.mxu0 0
    %489 = vmatpush2.bf16.msra.mxu0 0
    %490 = vmatprep.subr.bf16.mxu0 0
    %491 = vmatpush2.bf16.msra.mxu0 0
    %492 = vmatprep.subr.bf16.mxu0 0
    %493 = vmatpush2.bf16.msra.mxu0 0
    %494 = vmatprep.subr.bf16.mxu0 0
    %495 = vmatpush2.bf16.msra.mxu0 0
    %496 = vmatprep.subr.bf16.mxu0 0
    %497 = vmatpush2.bf16.msra.mxu0 0
    %498 = vmatprep.subr.bf16.mxu0 0
    %499 = vmatpush2.bf16.msra.mxu0 0
    %500 = vmatprep.mubr.bf16.mxu0 0
    %501 = vmatmul.mubr.bf16.gmra.mxu0 %v466
    %v502 = vpop.f32.mrf.mxu0
    %v503 = vadd.f32 0.0, %v502
    %v504 = vpop.f32.mrf.mxu0
    %v505 = vpop.f32.mrf.mxu0
    %v506 = vadd.f32 0.0, %v505
    %v507 = vpop.f32.mrf.mxu0
    %508 = vdwg.mxu0
    %v510 = vsel %vm424, %v462, 0
    %512 = vmatprep.subr.bf16.mxu0 0
    %513 = vmatpush1.bf16.msra.mxu0 0
    %514 = vmatprep.subr.bf16.mxu0 0
    %515 = vmatpush1.bf16.msra.mxu0 0
    %516 = vmatprep.subr.bf16.mxu0 0
    %517 = vmatpush1.bf16.msra.mxu0 0
    %518 = vmatprep.subr.bf16.mxu0 0
    %519 = vmatpush1.bf16.msra.mxu0 0
    %520 = vmatprep.subr.bf16.mxu0 0
    %521 = vmatpush1.bf16.msra.mxu0 0
    %522 = vmatprep.subr.bf16.mxu0 0
    %523 = vmatpush1.bf16.msra.mxu0 0
    %524 = vmatprep.subr.bf16.mxu0 0
    %525 = vmatpush1.bf16.msra.mxu0 0
    %526 = vmatprep.subr.bf16.mxu0 0
    %527 = vmatpush1.bf16.msra.mxu0 %v464
    %528 = vmatprep.subr.bf16.mxu0 0
    %529 = vmatpush2.bf16.msra.mxu0 0
    %530 = vmatprep.subr.bf16.mxu0 0
    %531 = vmatpush2.bf16.msra.mxu0 0
    %532 = vmatprep.subr.bf16.mxu0 0
    %533 = vmatpush2.bf16.msra.mxu0 0
    %534 = vmatprep.subr.bf16.mxu0 0
    %535 = vmatpush2.bf16.msra.mxu0 0
    %536 = vmatprep.subr.bf16.mxu0 0
    %537 = vmatpush2.bf16.msra.mxu0 0
    %538 = vmatprep.subr.bf16.mxu0 0
    %539 = vmatpush2.bf16.msra.mxu0 0
    %540 = vmatprep.subr.bf16.mxu0 0
    %541 = vmatpush2.bf16.msra.mxu0 0
    %542 = vmatprep.subr.bf16.mxu0 0
    %543 = vmatpush2.bf16.msra.mxu0 0
    %544 = vmatprep.mubr.bf16.mxu0 0
    %545 = vmatmul.mubr.bf16.gmra.mxu0 %v510
    %v546 = vpop.f32.mrf.mxu0
    %v547 = vadd.f32 0.0, %v546
    %v548 = vpop.f32.mrf.mxu0
    %v549 = vpop.f32.mrf.mxu0
    %v550 = vadd.f32 0.0, %v549
    %v551 = vpop.f32.mrf.mxu0
    %552 = vdwg.mxu0
    %v553 = vrcp.pop %v451
    %v554 = vrcp.pop %v454
    %v555 = vrcp.pop %v457
    %v556 = vrcp.pop %v460
    %v557 = vmul.f32 %v503, %v553
    %v558 = vmul.f32 %v506, %v554
    %v559 = vmul.f32 %v547, %v555
    %v560 = vmul.f32 %v550, %v556
    %561 = vst [vmem:[#allocation7] sm:$0xff] %v557
    %562 = vst [vmem:[#allocation7 + $0x8] sm:$0xff] %v558
    %563 = vst [vmem:[#allocation7 + $0x10] sm:$0xff] %v559
    %564 = vst [vmem:[#allocation7 + $0x18] sm:$0xff] %v560
    // Predicated region
    $region18: #{tpu_custom_call.1} parent=1 // pred_check
      _
    $region19: #{tpu_custom_call.1} parent=1 // pred_check_branch
      %566 = sbr.rel (0) target = $region21
    $region20: #{tpu_custom_call.1} parent=1 // pred_region
      %s568 = ssub.s32 512, 512
      %569 = vsyncadd [#allocation4], %s568
      %s570 = sshll.u32 [#allocation7], 4
      %s571 = int_to_ptr.vmem [resolvable:$true] %s570
      %576 = dma.vmem_to_hbm [thread:$0]  %s571, 512, %s2, [#allocation4], 128, 128, 8
    $region21: #{tpu_custom_call.1} parent=1 // pred_fallthru
      _
    // Predicated region
    $region22: #{tpu_custom_call.1} parent=1 // pred_check
      _
    $region23: #{tpu_custom_call.1} parent=1 // pred_check_branch
      %578 = sbr.rel (0) target = $region25
    $region24: #{tpu_custom_call.1} parent=1 // pred_region
      %579 = dma.done [#allocation4], 512
    $region25: #{tpu_custom_call.1} parent=1 // pred_fallthru
      _
    %580 = vsyncpa [#allocation3], 1
    %581 = vsyncpa [#allocation6], 1
    %582 = vsyncpa [#allocation4], 1

</llo_original>
